<compile_context>
chip_gen: v7x
topology: tpu7x:2x2x1
jax: 0.10.0
libtpu: 0.0.40
codegen_flags: <defaults>
</compile_context>

<pallas_src>
import functools

import jax
import jax.numpy as jnp
from jax.experimental import pallas as pl
from jax.experimental.pallas import tpu as pltpu

LANES = 128       # TPU vreg lane width
SUBLANES = 8      # TPU vreg sublane count
LDJ_LANES = 8     # narrow lane slab for the per-row log-det-jacobian writeback


def _round_up(x, m):
    return ((x + m - 1) // m) * m


def _pad2(a, rows, cols):
    a = jnp.asarray(a, dtype=jnp.float32)
    return jnp.pad(a, ((0, rows - a.shape[0]), (0, cols - a.shape[1])))


def _coupling_stack_kernel(z_ref, ldj_ref,
                           w1_ref, b1_ref, w2_ref, b2_ref, w3_ref, b3_ref,
                           z_out_ref, ldj_out_ref, *, num_layers, reverse):
    """Fused stack of coupling layers applied to one batch tile.

    z_ref   : (TB, Dp)      f32  (lane-padded; padded lanes stay exactly 0)
    ldj_ref : (TB, 1)       f32
    w1_ref  : (L, Dp, Hp)   bf16 (input mask folded into rows)
    w2_ref  : (L, Hp, Hp)   bf16
    w3_ref  : (L, Hp, 2*Dp) bf16 ([s | t] halves, (1-mask) folded into columns)
    b*_ref  : f32 biases ((1-mask) folded into b3)
    """
    dp = z_ref.shape[-1]
    z = z_ref[...].astype(jnp.float32)          # (TB, Dp)
    ldj = ldj_ref[...].astype(jnp.float32)      # (TB, 1)
    mm_dtype = w1_ref.dtype

    order = range(num_layers - 1, -1, -1) if reverse else range(num_layers)
    for l in order:                             # static (unrolled) layer loop
        w1 = w1_ref[l]
        w2 = w2_ref[l]
        w3 = w3_ref[l]
        b1 = b1_ref[l]
        b2 = b2_ref[l]
        b3 = b3_ref[l]

        # network(z * mask): Linear -> ReLU -> Linear -> ReLU -> Linear.
        # The mask is folded into w1 (exact for 0/1 masks), so no explicit
        # elementwise mask multiply is needed.
        h1 = jnp.dot(z.astype(mm_dtype), w1, preferred_element_type=jnp.float32) + b1
        h1 = jnp.maximum(h1, 0.0)
        h2 = jnp.dot(h1.astype(mm_dtype), w2, preferred_element_type=jnp.float32) + b2
        h2 = jnp.maximum(h2, 0.0)
        # Single N = 2*Dp matmul; s/t split is a free 128-aligned lane slice.
        st = jnp.dot(h2.astype(mm_dtype), w3, preferred_element_type=jnp.float32) + b3
        s = st[:, :dp]
        t = st[:, dp:]

        if not reverse:
            z = (z + t) * jnp.exp(s)
            ldj = ldj + jnp.sum(s, axis=1, keepdims=True)
        else:
            z = z * jnp.exp(-s) - t
            ldj = ldj - jnp.sum(s, axis=1, keepdims=True)

    z_out_ref[...] = z.astype(z_out_ref.dtype)
    # Narrow (8-lane) ldj slab: contiguous store, 16x less writeback traffic
    # than a full 128-lane slab.  The wrapper reads back column 0.
    ldj_out_ref[...] = jnp.broadcast_to(ldj, ldj_out_ref.shape).astype(ldj_out_ref.dtype)


def prepare_coupling_stack(layer_params, layer_masks, matmul_dtype=jnp.bfloat16):
    """One-time packing (call at init, not per step).

    Folds each layer's 0/1 mask into its weights (mask -> w1 rows,
    (1-mask) -> w3 columns / b3), pads feature dims to 128-lane multiples,
    concatenates the w3 s/t halves at the Dp boundary and casts matmul weights
    to bf16.  All folds are exact for 0/1 masks.
    """
    assert len(layer_params) == len(layer_masks) and layer_params
    D = int(layer_masks[0].shape[-1])
    H = int(layer_params[0]["w1"].shape[1])
    Dp = _round_up(D, LANES)
    Hp = _round_up(H, LANES)

    w1s, b1s, w2s, b2s, w3s, b3s = [], [], [], [], [], []
    for p, mask in zip(layer_params, layer_masks):
        mask = jnp.asarray(mask, jnp.float32).reshape(D)
        inv_mask = 1.0 - mask
        # (z * mask) @ w1 == z @ (mask[:, None] * w1)
        w1 = p["w1"] * mask[:, None]
        # (h2 @ w3_x + b3_x) * (1-mask) == h2 @ (w3_x * (1-mask)) + b3_x * (1-mask)
        w3_s = p["w3"][:, :D] * inv_mask[None, :]
        w3_t = p["w3"][:, D:] * inv_mask[None, :]
        b3_s = p["b3"][:D] * inv_mask
        b3_t = p["b3"][D:] * inv_mask

        w1s.append(_pad2(w1, Dp, Hp))
        b1s.append(_pad2(p["b1"].reshape(1, H), 1, Hp))
        w2s.append(_pad2(p["w2"], Hp, Hp))
        b2s.append(_pad2(p["b2"].reshape(1, H), 1, Hp))
        w3s.append(jnp.concatenate([_pad2(w3_s, Hp, Dp), _pad2(w3_t, Hp, Dp)], axis=1))
        b3s.append(jnp.concatenate([_pad2(b3_s.reshape(1, D), 1, Dp),
                                    _pad2(b3_t.reshape(1, D), 1, Dp)], axis=1))

    return {
        "num_layers": len(layer_params), "D": D, "H": H, "Dp": Dp, "Hp": Hp,
        "w1": jnp.stack(w1s).astype(matmul_dtype),   # (L, Dp, Hp)
        "b1": jnp.stack(b1s),                        # (L, 1, Hp)   f32
        "w2": jnp.stack(w2s).astype(matmul_dtype),   # (L, Hp, Hp)
        "b2": jnp.stack(b2s),                        # (L, 1, Hp)   f32
        "w3": jnp.stack(w3s).astype(matmul_dtype),   # (L, Hp, 2*Dp)
        "b3": jnp.stack(b3s),                        # (L, 1, 2*Dp) f32
    }


def _choose_tiling(B, max_tile_b):
    """Pick (tile_b, num_tiles) so that padding waste is minimal and large
    batches get >=2 grid steps (v7x has 2 TensorCores to shard over)."""
    min_tiles = 2 if B > 2 * SUBLANES else 1
    num_tiles = max(pl.cdiv(B, max_tile_b), min_tiles)
    tile_b = _round_up(pl.cdiv(B, num_tiles), SUBLANES)
    num_tiles = pl.cdiv(B, tile_b)
    return tile_b, num_tiles


def coupling_stack(z, ldj, packed, *, reverse=False, max_tile_b=1024):
    """Apply a fused stack of coupling layers in one pallas_call.

    reverse=True runs the layers in reverse order with each layer inverted.
    With a single layer this is exactly CouplingLayer.forward(z, ldj, reverse).
    z: (B, D) f32, ldj: (B,) f32, packed: prepare_coupling_stack() output.
    """
    B, D = z.shape
    assert D == packed["D"], "mask / params dimension mismatch"
    Dp, Hp, L = packed["Dp"], packed["Hp"], packed["num_layers"]

    tile_b, num_tiles = _choose_tiling(B, max_tile_b)
    B_pad = tile_b * num_tiles

    # One pad at stack entry / one slice at exit — amortized over the L fused
    # layers (no per-layer HBM round trips of z / ldj).
    z_p = jnp.pad(z.astype(jnp.float32), ((0, B_pad - B), (0, Dp - D)))
    ldj_p = jnp.pad(ldj.astype(jnp.float32).reshape(B, 1), ((0, B_pad - B), (0, 0)))

    kernel = functools.partial(_coupling_stack_kernel, num_layers=L, reverse=reverse)

    batch_map = lambda i: (i, 0)
    resident = lambda i: (0, 0, 0)     # same block every step -> stays in VMEM

    mm_bytes = jnp.dtype(packed["w1"].dtype).itemsize
    w_elems = L * (Dp * Hp + Hp * Hp + Hp * 2 * Dp)
    flops = 2 * B_pad * w_elems
    bytes_accessed = (2 * B_pad * Dp * 4                       # z in + z out
                      + B_pad * (1 + LDJ_LANES) * 4            # ldj in + slab out
                      + w_elems * mm_bytes                     # resident weights
                      + L * (2 * Hp + 2 * Dp) * 4)             # biases

    z_out, ldj_out = pl.pallas_call(
        kernel,
        out_shape=(
            jax.ShapeDtypeStruct((B_pad, Dp), jnp.float32),
            jax.ShapeDtypeStruct((B_pad, LDJ_LANES), jnp.float32),
        ),
        grid_spec=pltpu.PrefetchScalarGridSpec(
            num_scalar_prefetch=0,
            grid=(num_tiles,),
            in_specs=[
                pl.BlockSpec((tile_b, Dp), batch_map),          # z
                pl.BlockSpec((tile_b, 1), batch_map),           # ldj
                pl.BlockSpec((L, Dp, Hp), resident),            # w1 (mask folded)
                pl.BlockSpec((L, 1, Hp), resident),             # b1
                pl.BlockSpec((L, Hp, Hp), resident),            # w2
                pl.BlockSpec((L, 1, Hp), resident),             # b2
                pl.BlockSpec((L, Hp, 2 * Dp), resident),        # w3 = [s | t]
                pl.BlockSpec((L, 1, 2 * Dp), resident),         # b3 = [s | t]
            ],
            out_specs=(
                pl.BlockSpec((tile_b, Dp), batch_map),          # z out
                pl.BlockSpec((tile_b, LDJ_LANES), batch_map),   # ldj (8-lane slab)
            ),
        ),
        compiler_params=pltpu.CompilerParams(
            dimension_semantics=("parallel",),   # shard batch tiles across v7x's 2 TCs
            vmem_limit_bytes=32 * 1024 * 1024,   # safe on every generation incl. v7x
        ),
        cost_estimate=pl.CostEstimate(
            flops=flops,
            transcendentals=L * B_pad * Dp,
            bytes_accessed=bytes_accessed,
        ),
    )(z_p, ldj_p, packed["w1"], packed["b1"], packed["w2"], packed["b2"],
      packed["w3"], packed["b3"])

    return z_out[:B, :D], ldj_out[:B, 0]


def _reference_stack(z, ldj, masks, layer_params, reverse=False, matmul_dtype=None):
    """Plain-JAX reference: a loop of PyTorch-equivalent CouplingLayers.
    If matmul_dtype is given, matmul inputs are cast (mirrors the kernel's
    bf16 MXU feeds) while everything else stays f32."""
    def mm(x, w):
        if matmul_dtype is not None:
            x = x.astype(matmul_dtype)
            w = w.astype(matmul_dtype)
        return jnp.dot(x, w, preferred_element_type=jnp.float32)

    L = len(layer_params)
    order = range(L - 1, -1, -1) if reverse else range(L)
    D = z.shape[1]
    for l in order:
        p, mask = layer_params[l], masks[l]
        z_in = z * mask
        h1 = jax.nn.relu(mm(z_in, p["w1"]) + p["b1"])
        h2 = jax.nn.relu(mm(h1, p["w2"]) + p["b2"])
        st = mm(h2, p["w3"]) + p["b3"]
        s = st[:, :D] * (1.0 - mask)
        t = st[:, D:] * (1.0 - mask)
        if not reverse:
            z = (z + t) * jnp.exp(s)
            ldj = ldj + s.sum(axis=1)
        else:
            z = z * jnp.exp(-s) - t
            ldj = ldj - s.sum(axis=1)
    return z, ldj


if __name__ == "__main__":
    B, D, H, L = 8, 4, 32, 4

    key = jax.random.PRNGKey(0)
    kz, *layer_keys = jax.random.split(key, 1 + 6 * L)

    z = jax.random.normal(kz, (B, D), dtype=jnp.float32)
    ldj = jnp.zeros((B,), dtype=jnp.float32)

    # Alternating feature masks, as in a toy RealNVP flow.
    base_mask = jnp.asarray([1.0, 0.0] * (D // 2), dtype=jnp.float32)
    masks = [base_mask if l % 2 == 0 else 1.0 - base_mask for l in range(L)]

    def make_params(keys):
        k1, k2, k3, k4, k5, k6 = keys
        return {
            "w1": 0.1 * jax.random.normal(k1, (D, H), dtype=jnp.float32),
            "b1": 0.1 * jax.random.normal(k2, (H,), dtype=jnp.float32),
            "w2": 0.1 * jax.random.normal(k3, (H, H), dtype=jnp.float32),
            "b2": 0.1 * jax.random.normal(k4, (H,), dtype=jnp.float32),
            "w3": 0.1 * jax.random.normal(k5, (H, 2 * D), dtype=jnp.float32),
            "b3": 0.1 * jax.random.normal(k6, (2 * D,), dtype=jnp.float32),
        }

    layer_params = [make_params(layer_keys[6 * l: 6 * (l + 1)]) for l in range(L)]

    # ---- Single layer (exactly the original PyTorch CouplingLayer) ----
    packed1 = prepare_coupling_stack(layer_params[:1], masks[:1])
    z1, ldj1 = coupling_stack(z, ldj, packed1, reverse=False)
    jax.block_until_ready((z1, ldj1))

    z1_bf, ldj1_bf = _reference_stack(z, ldj, masks[:1], layer_params[:1],
                                      matmul_dtype=jnp.bfloat16)
    assert jnp.allclose(z1, z1_bf, atol=1e-4, rtol=1e-4)
    assert jnp.allclose(ldj1, ldj1_bf, atol=1e-4, rtol=1e-4)
    z1_32, ldj1_32 = _reference_stack(z, ldj, masks[:1], layer_params[:1])
    assert jnp.allclose(z1, z1_32, atol=5e-2, rtol=5e-2)
    assert jnp.allclose(ldj1, ldj1_32, atol=5e-2, rtol=5e-2)

    z1_inv, ldj1_inv = coupling_stack(z1, ldj1, packed1, reverse=True)
    jax.block_until_ready((z1_inv, ldj1_inv))
    assert jnp.allclose(z1_inv, z, atol=1e-4, rtol=1e-4)
    assert jnp.allclose(ldj1_inv, ldj, atol=1e-4, rtol=1e-4)

    # ---- Fused 4-layer stack in a single pallas_call ----
    packed = prepare_coupling_stack(layer_params, masks)
    z_out, ldj_out = coupling_stack(z, ldj, packed, reverse=False)
    jax.block_until_ready((z_out, ldj_out))

    z_bf, ldj_bf = _reference_stack(z, ldj, masks, layer_params,
                                    matmul_dtype=jnp.bfloat16)
    assert jnp.allclose(z_out, z_bf, atol=1e-3, rtol=1e-3)
    assert jnp.allclose(ldj_out, ldj_bf, atol=1e-3, rtol=1e-3)
    z_32, ldj_32 = _reference_stack(z, ldj, masks, layer_params)
    assert jnp.allclose(z_out, z_32, atol=5e-2, rtol=5e-2)
    assert jnp.allclose(ldj_out, ldj_32, atol=5e-2, rtol=5e-2)

    # Reverse path inverts the fused forward stack.
    z_inv, ldj_inv = coupling_stack(z_out, ldj_out, packed, reverse=True)
    jax.block_until_ready((z_inv, ldj_inv))
    assert jnp.allclose(z_inv, z, atol=1e-3, rtol=1e-3)
    assert jnp.allclose(ldj_inv, ldj, atol=1e-3, rtol=1e-3)

    print("KERNEL_OK")
</pallas_src>

<mosaic_0001>
module attributes {stable_mosaic.version = 11 : i64} {
  func.func @_coupling_stack_kernel(%arg0: i32, %arg1: memref<8x128xf32, #tpu.memory_space<vmem>>, %arg2: memref<8x1xf32, #tpu.memory_space<vmem>>, %arg3: memref<1x128x128xbf16, #tpu.memory_space<vmem>>, %arg4: memref<1x1x128xf32, #tpu.memory_space<vmem>>, %arg5: memref<1x128x128xbf16, #tpu.memory_space<vmem>>, %arg6: memref<1x1x128xf32, #tpu.memory_space<vmem>>, %arg7: memref<1x128x256xbf16, #tpu.memory_space<vmem>>, %arg8: memref<1x1x256xf32, #tpu.memory_space<vmem>>, %arg9: memref<8x128xf32, #tpu.memory_space<vmem>>, %arg10: memref<8x8xf32, #tpu.memory_space<vmem>>) attributes {dimension_semantics = [#tpu.dimension_semantics<parallel>], iteration_bounds = array<i64: 1>, scalar_prefetch = 0 : i64, scratch_operands = 0 : i64, tpu.core_type = #tpu.core_type<tc>, window_params = [{transform_indices = @transform_0, window_bounds = array<i64: 8, 128>}, {transform_indices = @transform_1, window_bounds = array<i64: 8, 1>}, {pipeline_mode = #tpu.pipeline_mode<synchronous>, transform_indices = @transform_2, window_bounds = array<i64: 1, 128, 128>}, {pipeline_mode = #tpu.pipeline_mode<synchronous>, transform_indices = @transform_3, window_bounds = array<i64: 1, 1, 128>}, {pipeline_mode = #tpu.pipeline_mode<synchronous>, transform_indices = @transform_4, window_bounds = array<i64: 1, 128, 128>}, {pipeline_mode = #tpu.pipeline_mode<synchronous>, transform_indices = @transform_5, window_bounds = array<i64: 1, 1, 128>}, {pipeline_mode = #tpu.pipeline_mode<synchronous>, transform_indices = @transform_6, window_bounds = array<i64: 1, 128, 256>}, {pipeline_mode = #tpu.pipeline_mode<synchronous>, transform_indices = @transform_7, window_bounds = array<i64: 1, 1, 256>}, {transform_indices = @transform_8, window_bounds = array<i64: 8, 128>}, {transform_indices = @transform_9, window_bounds = array<i64: 8, 8>}]} {
    %c0 = arith.constant 0 : index
    %c0_0 = arith.constant 0 : index
    %0 = vector.load %arg1[%c0, %c0_0] : memref<8x128xf32, #tpu.memory_space<vmem>>, vector<8x128xf32>
    %c0_1 = arith.constant 0 : index
    %c0_2 = arith.constant 0 : index
    %1 = vector.load %arg2[%c0_1, %c0_2] : memref<8x1xf32, #tpu.memory_space<vmem>>, vector<8x1xf32>
    %c0_3 = arith.constant 0 : index
    %c0_4 = arith.constant 0 : index
    %c0_5 = arith.constant 0 : index
    %2 = vector.load %arg3[%c0_3, %c0_4, %c0_5] : memref<1x128x128xbf16, #tpu.memory_space<vmem>>, vector<1x128x128xbf16>
    %3 = vector.shape_cast %2 : vector<1x128x128xbf16> to vector<128x128xbf16>
    %c0_6 = arith.constant 0 : index
    %c0_7 = arith.constant 0 : index
    %c0_8 = arith.constant 0 : index
    %4 = vector.load %arg5[%c0_6, %c0_7, %c0_8] : memref<1x128x128xbf16, #tpu.memory_space<vmem>>, vector<1x128x128xbf16>
    %5 = vector.shape_cast %4 : vector<1x128x128xbf16> to vector<128x128xbf16>
    %c0_9 = arith.constant 0 : index
    %c0_10 = arith.constant 0 : index
    %c0_11 = arith.constant 0 : index
    %6 = vector.load %arg7[%c0_9, %c0_10, %c0_11] : memref<1x128x256xbf16, #tpu.memory_space<vmem>>, vector<1x128x256xbf16>
    %7 = vector.shape_cast %6 : vector<1x128x256xbf16> to vector<128x256xbf16>
    %c0_12 = arith.constant 0 : index
    %c0_13 = arith.constant 0 : index
    %c0_14 = arith.constant 0 : index
    %8 = vector.load %arg4[%c0_12, %c0_13, %c0_14] : memref<1x1x128xf32, #tpu.memory_space<vmem>>, vector<1x1x128xf32>
    %9 = vector.shape_cast %8 : vector<1x1x128xf32> to vector<1x128xf32>
    %c0_15 = arith.constant 0 : index
    %c0_16 = arith.constant 0 : index
    %c0_17 = arith.constant 0 : index
    %10 = vector.load %arg6[%c0_15, %c0_16, %c0_17] : memref<1x1x128xf32, #tpu.memory_space<vmem>>, vector<1x1x128xf32>
    %11 = vector.shape_cast %10 : vector<1x1x128xf32> to vector<1x128xf32>
    %c0_18 = arith.constant 0 : index
    %c0_19 = arith.constant 0 : index
    %c0_20 = arith.constant 0 : index
    %12 = vector.load %arg8[%c0_18, %c0_19, %c0_20] : memref<1x1x256xf32, #tpu.memory_space<vmem>>, vector<1x1x256xf32>
    %13 = vector.shape_cast %12 : vector<1x1x256xf32> to vector<1x256xf32>
    %14 = arith.truncf %0 : vector<8x128xf32> to vector<8x128xbf16>
    %cst = arith.constant dense<0.000000e+00> : vector<8x128xf32>
    %15 = tpu.matmul %14, %3, %cst {dimension_numbers = #tpu.dot_dimension_numbers<[1], [0], [0], [1], [0, 0, 1, 1], [], []>} : vector<8x128xbf16>, vector<128x128xbf16>, vector<8x128xf32> -> vector<8x128xf32>
    %16 = vector.broadcast %9 : vector<1x128xf32> to vector<8x128xf32>
    %17 = arith.addf %15, %16 : vector<8x128xf32>
    %cst_21 = arith.constant 0.000000e+00 : f32
    %18 = vector.broadcast %cst_21 : f32 to vector<8x128xf32>
    %19 = arith.maximumf %17, %18 : vector<8x128xf32>
    %20 = arith.truncf %19 : vector<8x128xf32> to vector<8x128xbf16>
    %cst_22 = arith.constant dense<0.000000e+00> : vector<8x128xf32>
    %21 = tpu.matmul %20, %5, %cst_22 {dimension_numbers = #tpu.dot_dimension_numbers<[1], [0], [0], [1], [0, 0, 1, 1], [], []>} : vector<8x128xbf16>, vector<128x128xbf16>, vector<8x128xf32> -> vector<8x128xf32>
    %22 = vector.broadcast %11 : vector<1x128xf32> to vector<8x128xf32>
    %23 = arith.addf %21, %22 : vector<8x128xf32>
    %cst_23 = arith.constant 0.000000e+00 : f32
    %24 = vector.broadcast %cst_23 : f32 to vector<8x128xf32>
    %25 = arith.maximumf %23, %24 : vector<8x128xf32>
    %26 = arith.truncf %25 : vector<8x128xf32> to vector<8x128xbf16>
    %cst_24 = arith.constant dense<0.000000e+00> : vector<8x256xf32>
    %27 = tpu.matmul %26, %7, %cst_24 {dimension_numbers = #tpu.dot_dimension_numbers<[1], [0], [0], [1], [0, 0, 1, 1], [], []>} : vector<8x128xbf16>, vector<128x256xbf16>, vector<8x256xf32> -> vector<8x256xf32>
    %28 = vector.broadcast %13 : vector<1x256xf32> to vector<8x256xf32>
    %29 = arith.addf %27, %28 : vector<8x256xf32>
    %30 = vector.extract_strided_slice %29 {offsets = [0, 0], sizes = [8, 128], strides = [1, 1]} : vector<8x256xf32> to vector<8x128xf32>
    %31 = vector.extract_strided_slice %29 {offsets = [0, 128], sizes = [8, 128], strides = [1, 1]} : vector<8x256xf32> to vector<8x128xf32>
    %32 = arith.addf %0, %31 : vector<8x128xf32>
    %33 = math.exp %30 : vector<8x128xf32>
    %34 = arith.mulf %32, %33 : vector<8x128xf32>
    %cst_25 = arith.constant dense<0.000000e+00> : vector<8xf32>
    %35 = vector.multi_reduction <add>, %30, %cst_25 [1] : vector<8x128xf32> to vector<8xf32>
    %36 = vector.shape_cast %35 : vector<8xf32> to vector<8x1xf32>
    %37 = arith.addf %1, %36 : vector<8x1xf32>
    %c0_26 = arith.constant 0 : index
    %c0_27 = arith.constant 0 : index
    %38 = vector.load %arg9[%c0_26, %c0_27] : memref<8x128xf32, #tpu.memory_space<vmem>>, vector<8x128xf32>
    tpu.vector_store %arg9[%c0_26, %c0_27], %34 {strides = array<i32>} : memref<8x128xf32, #tpu.memory_space<vmem>>, vector<8x128xf32>,
    %39 = vector.shape_cast %37 : vector<8x1xf32> to vector<8x1xf32>
    %40 = vector.broadcast %39 : vector<8x1xf32> to vector<8x8xf32>
    %c0_28 = arith.constant 0 : index
    %c0_29 = arith.constant 0 : index
    %41 = vector.load %arg10[%c0_28, %c0_29] : memref<8x8xf32, #tpu.memory_space<vmem>>, vector<8x8xf32>
    tpu.vector_store %arg10[%c0_28, %c0_29], %40 {strides = array<i32>} : memref<8x8xf32, #tpu.memory_space<vmem>>, vector<8x8xf32>,
    return
  }
  func.func @transform_0(%arg0: i32) -> (i32, i32) {
    %c0_i32 = arith.constant 0 : i32
    %c0_i32_0 = arith.constant 0 : i32
    return %arg0, %c0_i32 : i32, i32
  }
  func.func @transform_1(%arg0: i32) -> (i32, i32) {
    %c0_i32 = arith.constant 0 : i32
    %c0_i32_0 = arith.constant 0 : i32
    return %arg0, %c0_i32 : i32, i32
  }
  func.func @transform_2(%arg0: i32) -> (i32, i32, i32) {
    %c0_i32 = arith.constant 0 : i32
    %c0_i32_0 = arith.constant 0 : i32
    %c0_i32_1 = arith.constant 0 : i32
    %c0_i32_2 = arith.constant 0 : i32
    return %c0_i32, %c0_i32_0, %c0_i32_1 : i32, i32, i32
  }
  func.func @transform_3(%arg0: i32) -> (i32, i32, i32) {
    %c0_i32 = arith.constant 0 : i32
    %c0_i32_0 = arith.constant 0 : i32
    %c0_i32_1 = arith.constant 0 : i32
    %c0_i32_2 = arith.constant 0 : i32
    return %c0_i32, %c0_i32_0, %c0_i32_1 : i32, i32, i32
  }
  func.func @transform_4(%arg0: i32) -> (i32, i32, i32) {
    %c0_i32 = arith.constant 0 : i32
    %c0_i32_0 = arith.constant 0 : i32
    %c0_i32_1 = arith.constant 0 : i32
    %c0_i32_2 = arith.constant 0 : i32
    return %c0_i32, %c0_i32_0, %c0_i32_1 : i32, i32, i32
  }
  func.func @transform_5(%arg0: i32) -> (i32, i32, i32) {
    %c0_i32 = arith.constant 0 : i32
    %c0_i32_0 = arith.constant 0 : i32
    %c0_i32_1 = arith.constant 0 : i32
    %c0_i32_2 = arith.constant 0 : i32
    return %c0_i32, %c0_i32_0, %c0_i32_1 : i32, i32, i32
  }
  func.func @transform_6(%arg0: i32) -> (i32, i32, i32) {
    %c0_i32 = arith.constant 0 : i32
    %c0_i32_0 = arith.constant 0 : i32
    %c0_i32_1 = arith.constant 0 : i32
    %c0_i32_2 = arith.constant 0 : i32
    return %c0_i32, %c0_i32_0, %c0_i32_1 : i32, i32, i32
  }
  func.func @transform_7(%arg0: i32) -> (i32, i32, i32) {
    %c0_i32 = arith.constant 0 : i32
    %c0_i32_0 = arith.constant 0 : i32
    %c0_i32_1 = arith.constant 0 : i32
    %c0_i32_2 = arith.constant 0 : i32
    return %c0_i32, %c0_i32_0, %c0_i32_1 : i32, i32, i32
  }
  func.func @transform_8(%arg0: i32) -> (i32, i32) {
    %c0_i32 = arith.constant 0 : i32
    %c0_i32_0 = arith.constant 0 : i32
    return %arg0, %c0_i32 : i32, i32
  }
  func.func @transform_9(%arg0: i32) -> (i32, i32) {
    %c0_i32 = arith.constant 0 : i32
    %c0_i32_0 = arith.constant 0 : i32
    return %arg0, %c0_i32 : i32, i32
  }
}

</mosaic_0001>

<llo_original>
// kernel: tpu_custom_call.1
$region0: #{tpu_custom_call.1}
  #allocation0 [shape = 'u32[]', space=smem, size = 0x4, offset = 0x4, fixed_abs, tag = 'smem constant byte address 0x4 - core index']
  #allocation1 [shape = 'u32[144,128]{1,0:T(1,128)}', space=vmem, size = 0x12000, scoped, tag = 'internal scratch']
  %s0 = inlined_call_operand.vmem [shape: f32[8,128], index: 0, kind: input, shape index: {}]
  %s1 = inlined_call_operand.vmem [shape: f32[8,1], index: 1, kind: input, shape index: {}]
  %s2 = inlined_call_operand.hbm [shape: bf16[1,128,128], index: 2, kind: input, shape index: {}]
  %s3 = inlined_call_operand.vmem [shape: f32[1,1,128], index: 3, kind: input, shape index: {}]
  %s4 = inlined_call_operand.hbm [shape: bf16[1,128,128], index: 4, kind: input, shape index: {}]
  %s5 = inlined_call_operand.vmem [shape: f32[1,1,128], index: 5, kind: input, shape index: {}]
  %s6 = inlined_call_operand.hbm [shape: bf16[1,128,256], index: 6, kind: input, shape index: {}]
  %s7 = inlined_call_operand.vmem [shape: f32[1,1,256], index: 7, kind: input, shape index: {}]
  %s8 = inlined_call_operand.hbm [shape: f32[8,128], index: 8, kind: output, shape index: {0}]
  %s9 = inlined_call_operand.hbm [shape: f32[8,8], index: 9, kind: output, shape index: {1}]
  %10 = xla_tuple %s8, %s9
  %s11 = sld [smem:[#allocation0]]
  $region62: #{tpu_custom_call.1} parent=0
    _
  %s13 = ssub.s32 1, %s11
  %s14 = scalar_select 0, %s13, %s11
  $region1: #{tpu_custom_call.1} parent=0
    #allocation2 [shape = 'u8[32768]{0}', space=vmem, size = 0x8000, scoped, tag = 'input window, operand 2, single buffered']
    #allocation3 [shape = 's32[1]{0}', space=sflag, size = 0x4, scoped, tag = 'scoped memory for tpu_custom_call.1']
    #allocation4 [shape = 's32[1]{0}', space=sflag, size = 0x4, scoped, tag = 'scoped memory for tpu_custom_call.1']
    #allocation5 [shape = 'u8[32768]{0}', space=vmem, size = 0x8000, scoped, tag = 'input window, operand 4, single buffered']
    #allocation6 [shape = 's32[1]{0}', space=sflag, size = 0x4, scoped, tag = 'scoped memory for tpu_custom_call.1']
    #allocation7 [shape = 'u8[65536]{0}', space=vmem, size = 0x10000, scoped, tag = 'input window, operand 6, single buffered']
    #allocation8 [shape = 'u8[4096]{0}', space=vmem, size = 0x1000, scoped, tag = 'output window, operand 0, single buffered']
    #allocation9 [shape = 'u8[4096]{0}', space=vmem, size = 0x1000, scoped, tag = 'output window, operand 1, single buffered']
    #allocation10 [shape = 's32[1]{0}', space=sflag, size = 0x4, scoped, tag = 'scoped memory for tpu_custom_call.1']
    %15 = vsyncpa [#allocation3], 0
    %16 = vsyncpa [#allocation6], 0
    %17 = vsyncpa [#allocation4], 0
    %18 = vsyncpa [#allocation10], 0
    // Predicated region
    $region2: #{tpu_custom_call.1} parent=1 // pred_check
      _
    $region3: #{tpu_custom_call.1} parent=1 // pred_check_branch
      %20 = sbr.rel (0) target = $region5
    $region4: #{tpu_custom_call.1} parent=1 // pred_region
      _
    $region5: #{tpu_custom_call.1} parent=1 // pred_fallthru
      _
    // Predicated region
    $region6: #{tpu_custom_call.1} parent=1 // pred_check
      _
    $region7: #{tpu_custom_call.1} parent=1 // pred_check_branch
      %22 = sbr.rel (0) target = $region9
    $region8: #{tpu_custom_call.1} parent=1 // pred_region
      _
    $region9: #{tpu_custom_call.1} parent=1 // pred_fallthru
      _
    // Predicated region
    $region10: #{tpu_custom_call.1} parent=1 // pred_check
      _
    $region11: #{tpu_custom_call.1} parent=1 // pred_check_branch
      %24 = sbr.rel (0) target = $region13
    $region12: #{tpu_custom_call.1} parent=1 // pred_region
      %s26 = ssub.s32 1024, 1024
      %27 = vsyncadd [#allocation3], %s26
      %s28 = sshll.u32 [#allocation2], 4
      %s29 = int_to_ptr.vmem [resolvable:$true] %s28
      %34 = dma.hbm_to_vmem [thread:$0]  %s2, 1024, %s29, [#allocation3], 64, 64, 4
    $region13: #{tpu_custom_call.1} parent=1 // pred_fallthru
      _
    // Predicated region
    $region14: #{tpu_custom_call.1} parent=1 // pred_check
      _
    $region15: #{tpu_custom_call.1} parent=1 // pred_check_branch
      %36 = sbr.rel (0) target = $region17
    $region16: #{tpu_custom_call.1} parent=1 // pred_region
      _
    $region17: #{tpu_custom_call.1} parent=1 // pred_fallthru
      _
    // Predicated region
    $region18: #{tpu_custom_call.1} parent=1 // pred_check
      _
    $region19: #{tpu_custom_call.1} parent=1 // pred_check_branch
      %38 = sbr.rel (0) target = $region21
    $region20: #{tpu_custom_call.1} parent=1 // pred_region
      %s40 = ssub.s32 1024, 1024
      %41 = vsyncadd [#allocation6], %s40
      %s42 = sshll.u32 [#allocation5], 4
      %s43 = int_to_ptr.vmem [resolvable:$true] %s42
      %48 = dma.hbm_to_vmem [thread:$0]  %s4, 1024, %s43, [#allocation6], 64, 64, 4
    $region21: #{tpu_custom_call.1} parent=1 // pred_fallthru
      _
    // Predicated region
    $region22: #{tpu_custom_call.1} parent=1 // pred_check
      _
    $region23: #{tpu_custom_call.1} parent=1 // pred_check_branch
      %50 = sbr.rel (0) target = $region25
    $region24: #{tpu_custom_call.1} parent=1 // pred_region
      _
    $region25: #{tpu_custom_call.1} parent=1 // pred_fallthru
      _
    // Predicated region
    $region26: #{tpu_custom_call.1} parent=1 // pred_check
      _
    $region27: #{tpu_custom_call.1} parent=1 // pred_check_branch
      %52 = sbr.rel (0) target = $region29
    $region28: #{tpu_custom_call.1} parent=1 // pred_region
      %s54 = ssub.s32 2048, 2048
      %55 = vsyncadd [#allocation6], %s54
      %s56 = sshll.u32 [#allocation7], 4
      %s57 = int_to_ptr.vmem [resolvable:$true] %s56
      %62 = dma.hbm_to_vmem [thread:$0]  %s6, 2048, %s57, [#allocation6], 128, 128, 8
    $region29: #{tpu_custom_call.1} parent=1 // pred_fallthru
      _
    // Predicated region
    $region30: #{tpu_custom_call.1} parent=1 // pred_check
      _
    $region31: #{tpu_custom_call.1} parent=1 // pred_check_branch
      %64 = sbr.rel (0) target = $region33
    $region32: #{tpu_custom_call.1} parent=1 // pred_region
      _
    $region33: #{tpu_custom_call.1} parent=1 // pred_fallthru
      _
    // Predicated region
    $region34: #{tpu_custom_call.1} parent=1 // pred_check
      _
    $region35: #{tpu_custom_call.1} parent=1 // pred_check_branch
      %66 = sbr.rel (0) target = $region37
    $region36: #{tpu_custom_call.1} parent=1 // pred_region
      %67 = dma.done [#allocation3], 1024
    $region37: #{tpu_custom_call.1} parent=1 // pred_fallthru
      _
    // Predicated region
    $region38: #{tpu_custom_call.1} parent=1 // pred_check
      _
    $region39: #{tpu_custom_call.1} parent=1 // pred_check_branch
      %69 = sbr.rel (0) target = $region41
    $region40: #{tpu_custom_call.1} parent=1 // pred_region
      %70 = dma.done [#allocation6], 1024
    $region41: #{tpu_custom_call.1} parent=1 // pred_fallthru
      _
    // Predicated region
    $region42: #{tpu_custom_call.1} parent=1 // pred_check
      _
    $region43: #{tpu_custom_call.1} parent=1 // pred_check_branch
      %72 = sbr.rel (0) target = $region45
    $region44: #{tpu_custom_call.1} parent=1 // pred_region
      %73 = dma.done [#allocation6], 2048
    $region45: #{tpu_custom_call.1} parent=1 // pred_fallthru
      _
    %v75 = vld [vmem:[%s0] sm:$0xff]
    %v76 = vld [vmem:[%s1] sm:$0xff]
    %v77 = vld [vmem:[#allocation2] sm:$0xf]
    %v78 = vld [vmem:[#allocation2 + $0x4] sm:$0xf]
    %v79 = vld [vmem:[#allocation2 + $0x8] sm:$0xf]
    %v80 = vld [vmem:[#allocation2 + $0xc] sm:$0xf]
    %v81 = vld [vmem:[#allocation2 + $0x10] sm:$0xf]
    %v82 = vld [vmem:[#allocation2 + $0x14] sm:$0xf]
    %v83 = vld [vmem:[#allocation2 + $0x18] sm:$0xf]
    %v84 = vld [vmem:[#allocation2 + $0x1c] sm:$0xf]
    %v85 = vld [vmem:[#allocation2 + $0x20] sm:$0xf]
    %v86 = vld [vmem:[#allocation2 + $0x24] sm:$0xf]
    %v87 = vld [vmem:[#allocation2 + $0x28] sm:$0xf]
    %v88 = vld [vmem:[#allocation2 + $0x2c] sm:$0xf]
    %v89 = vld [vmem:[#allocation2 + $0x30] sm:$0xf]
    %v90 = vld [vmem:[#allocation2 + $0x34] sm:$0xf]
    %v91 = vld [vmem:[#allocation2 + $0x38] sm:$0xf]
    %v92 = vld [vmem:[#allocation2 + $0x3c] sm:$0xf]
    %v93 = vld [vmem:[#allocation5] sm:$0xf]
    %v94 = vld [vmem:[#allocation5 + $0x4] sm:$0xf]
    %v95 = vld [vmem:[#allocation5 + $0x8] sm:$0xf]
    %v96 = vld [vmem:[#allocation5 + $0xc] sm:$0xf]
    %v97 = vld [vmem:[#allocation5 + $0x10] sm:$0xf]
    %v98 = vld [vmem:[#allocation5 + $0x14] sm:$0xf]
    %v99 = vld [vmem:[#allocation5 + $0x18] sm:$0xf]
    %v100 = vld [vmem:[#allocation5 + $0x1c] sm:$0xf]
    %v101 = vld [vmem:[#allocation5 + $0x20] sm:$0xf]
    %v102 = vld [vmem:[#allocation5 + $0x24] sm:$0xf]
    %v103 = vld [vmem:[#allocation5 + $0x28] sm:$0xf]
    %v104 = vld [vmem:[#allocation5 + $0x2c] sm:$0xf]
    %v105 = vld [vmem:[#allocation5 + $0x30] sm:$0xf]
    %v106 = vld [vmem:[#allocation5 + $0x34] sm:$0xf]
    %v107 = vld [vmem:[#allocation5 + $0x38] sm:$0xf]
    %v108 = vld [vmem:[#allocation5 + $0x3c] sm:$0xf]
    %v109 = vld [vmem:[#allocation7] sm:$0xff]
    %v110 = vld [vmem:[#allocation7 + $0x8] sm:$0xff]
    %v111 = vld [vmem:[#allocation7 + $0x10] sm:$0xff]
    %v112 = vld [vmem:[#allocation7 + $0x18] sm:$0xff]
    %v113 = vld [vmem:[#allocation7 + $0x20] sm:$0xff]
    %v114 = vld [vmem:[#allocation7 + $0x28] sm:$0xff]
    %v115 = vld [vmem:[#allocation7 + $0x30] sm:$0xff]
    %v116 = vld [vmem:[#allocation7 + $0x38] sm:$0xff]
    %v117 = vld [vmem:[#allocation7 + $0x40] sm:$0xff]
    %v118 = vld [vmem:[#allocation7 + $0x48] sm:$0xff]
    %v119 = vld [vmem:[#allocation7 + $0x50] sm:$0xff]
    %v120 = vld [vmem:[#allocation7 + $0x58] sm:$0xff]
    %v121 = vld [vmem:[#allocation7 + $0x60] sm:$0xff]
    %v122 = vld [vmem:[#allocation7 + $0x68] sm:$0xff]
    %v123 = vld [vmem:[#allocation7 + $0x70] sm:$0xff]
    %v124 = vld [vmem:[#allocation7 + $0x78] sm:$0xff]
    %v125 = vld [vmem:[%s3] sm:$0x1]
    %v126 = vld [vmem:[%s5] sm:$0x1]
    %v127 = vld [vmem:[%s7] sm:$0x3]
    %v128 = vpack.c.bf16 %v75, %v75
    %v130 = vlaneseq
    %v131 = vshrl.u32 %v130, 7
    %v132 = vsub.s32 0, %v131
    %v133 = vrot.slane %v125, %v132
    %v151 = vunpack.c.l.b16 %v77
    %v152 = vunpack.c.l.b16 %v78
    %v153 = vunpack.c.l.b16 %v79
    %v154 = vunpack.c.l.b16 %v80
    %v155 = vunpack.c.l.b16 %v81
    %v156 = vunpack.c.l.b16 %v82
    %v157 = vunpack.c.l.b16 %v83
    %v158 = vunpack.c.l.b16 %v84
    %v159 = vunpack.c.l.b16 %v85
    %v160 = vunpack.c.l.b16 %v86
    %v161 = vunpack.c.l.b16 %v87
    %v162 = vunpack.c.l.b16 %v88
    %v163 = vunpack.c.l.b16 %v89
    %v164 = vunpack.c.l.b16 %v90
    %v165 = vunpack.c.l.b16 %v91
    %v166 = vunpack.c.l.b16 %v92
    %v167 = vpack.c.b16 %v152, %v151
    %v168 = vpack.c.b16 %v154, %v153
    %v169 = vpack.c.b16 %v156, %v155
    %v170 = vpack.c.b16 %v158, %v157
    %v171 = vpack.c.b16 %v160, %v159
    %v172 = vpack.c.b16 %v162, %v161
    %v173 = vpack.c.b16 %v164, %v163
    %v174 = vpack.c.b16 %v166, %v165
    %183 = vmatprep.subr.bf16.mxu0 0
    %184 = vmatpush1.bf16.msra.mxu0 %v167
    %185 = vmatprep.subr.bf16.mxu0 0
    %186 = vmatpush1.bf16.msra.mxu0 %v168
    %187 = vmatprep.subr.bf16.mxu0 0
    %188 = vmatpush1.bf16.msra.mxu0 %v169
    %189 = vmatprep.subr.bf16.mxu0 0
    %190 = vmatpush1.bf16.msra.mxu0 %v170
    %191 = vmatprep.subr.bf16.mxu0 0
    %192 = vmatpush1.bf16.msra.mxu0 %v171
    %193 = vmatprep.subr.bf16.mxu0 0
    %194 = vmatpush1.bf16.msra.mxu0 %v172
    %195 = vmatprep.subr.bf16.mxu0 0
    %196 = vmatpush1.bf16.msra.mxu0 %v173
    %197 = vmatprep.subr.bf16.mxu0 0
    %198 = vmatpush1.bf16.msra.mxu0 %v174
    %199 = vmatprep.subr.bf16.mxu0 0
    %200 = vmatpush1.bf16.msra.mxu0 0
    %201 = vmatprep.subr.bf16.mxu0 0
    %202 = vmatpush1.bf16.msra.mxu0 0
    %203 = vmatprep.subr.bf16.mxu0 0
    %204 = vmatpush1.bf16.msra.mxu0 0
    %205 = vmatprep.subr.bf16.mxu0 0
    %206 = vmatpush1.bf16.msra.mxu0 0
    %207 = vmatprep.subr.bf16.mxu0 0
    %208 = vmatpush1.bf16.msra.mxu0 0
    %209 = vmatprep.subr.bf16.mxu0 0
    %210 = vmatpush1.bf16.msra.mxu0 0
    %211 = vmatprep.subr.bf16.mxu0 0
    %212 = vmatpush1.bf16.msra.mxu0 0
    %213 = vmatprep.subr.bf16.mxu0 0
    %214 = vmatpush1.bf16.msra.mxu0 0
    %215 = vmatprep.mubr.bf16.mxu0 0
    %216 = vmatmul.mubr.bf16.gmra.mrb[0].mxu0 %v128
    %v217 = vpop.f32.mrb[0].mxu0
    %v218 = vadd.f32 %v133, %v217
    %v219 = vpop.f32.mrb[0].mxu0
    %v220 = vpop.f32.mrb[0].mxu0
    %v221 = vpop.f32.mrb[0].mxu0
    %222 = vdwg.mxu0
    %v223 = vmax.f32 %v218, 0.0
    %v224 = vpack.c.bf16 %v223, %v223
    %v226 = vlaneseq
    %v227 = vshrl.u32 %v226, 7
    %v228 = vsub.s32 0, %v227
    %v229 = vrot.slane %v126, %v228
    %v247 = vunpack.c.l.b16 %v93
    %v248 = vunpack.c.l.b16 %v94
    %v249 = vunpack.c.l.b16 %v95
    %v250 = vunpack.c.l.b16 %v96
    %v251 = vunpack.c.l.b16 %v97
    %v252 = vunpack.c.l.b16 %v98
    %v253 = vunpack.c.l.b16 %v99
    %v254 = vunpack.c.l.b16 %v100
    %v255 = vunpack.c.l.b16 %v101
    %v256 = vunpack.c.l.b16 %v102
    %v257 = vunpack.c.l.b16 %v103
    %v258 = vunpack.c.l.b16 %v104
    %v259 = vunpack.c.l.b16 %v105
    %v260 = vunpack.c.l.b16 %v106
    %v261 = vunpack.c.l.b16 %v107
    %v262 = vunpack.c.l.b16 %v108
    %v263 = vpack.c.b16 %v248, %v247
    %v264 = vpack.c.b16 %v250, %v249
    %v265 = vpack.c.b16 %v252, %v251
    %v266 = vpack.c.b16 %v254, %v253
    %v267 = vpack.c.b16 %v256, %v255
    %v268 = vpack.c.b16 %v258, %v257
    %v269 = vpack.c.b16 %v260, %v259
    %v270 = vpack.c.b16 %v262, %v261
    %279 = vmatprep.subr.bf16.mxu0 0
    %280 = vmatpush1.bf16.msra.mxu0 %v263
    %281 = vmatprep.subr.bf16.mxu0 0
    %282 = vmatpush1.bf16.msra.mxu0 %v264
    %283 = vmatprep.subr.bf16.mxu0 0
    %284 = vmatpush1.bf16.msra.mxu0 %v265
    %285 = vmatprep.subr.bf16.mxu0 0
    %286 = vmatpush1.bf16.msra.mxu0 %v266
    %287 = vmatprep.subr.bf16.mxu0 0
    %288 = vmatpush1.bf16.msra.mxu0 %v267
    %289 = vmatprep.subr.bf16.mxu0 0
    %290 = vmatpush1.bf16.msra.mxu0 %v268
    %291 = vmatprep.subr.bf16.mxu0 0
    %292 = vmatpush1.bf16.msra.mxu0 %v269
    %293 = vmatprep.subr.bf16.mxu0 0
    %294 = vmatpush1.bf16.msra.mxu0 %v270
    %295 = vmatprep.subr.bf16.mxu0 0
    %296 = vmatpush1.bf16.msra.mxu0 0
    %297 = vmatprep.subr.bf16.mxu0 0
    %298 = vmatpush1.bf16.msra.mxu0 0
    %299 = vmatprep.subr.bf16.mxu0 0
    %300 = vmatpush1.bf16.msra.mxu0 0
    %301 = vmatprep.subr.bf16.mxu0 0
    %302 = vmatpush1.bf16.msra.mxu0 0
    %303 = vmatprep.subr.bf16.mxu0 0
    %304 = vmatpush1.bf16.msra.mxu0 0
    %305 = vmatprep.subr.bf16.mxu0 0
    %306 = vmatpush1.bf16.msra.mxu0 0
    %307 = vmatprep.subr.bf16.mxu0 0
    %308 = vmatpush1.bf16.msra.mxu0 0
    %309 = vmatprep.subr.bf16.mxu0 0
    %310 = vmatpush1.bf16.msra.mxu0 0
    %311 = vmatprep.mubr.bf16.mxu0 0
    %312 = vmatmul.mubr.bf16.gmra.mrb[0].mxu0 %v224
    %v313 = vpop.f32.mrb[0].mxu0
    %v314 = vadd.f32 %v229, %v313
    %v315 = vpop.f32.mrb[0].mxu0
    %v316 = vpop.f32.mrb[0].mxu0
    %v317 = vpop.f32.mrb[0].mxu0
    %318 = vdwg.mxu0
    %v319 = vmax.f32 %v314, 0.0
    %v320 = vpack.c.bf16 %v319, %v319
    %v322 = vlaneseq
    %v323 = vshrl.u32 %v322, 7
    %v324 = vsub.s32 0, %v323
    %v325 = vrot.slane %v127, %v324
    %v326 = vlaneseq
    %v327 = vshrl.u32 %v326, 7
    %v328 = vsub.s32 1, %v327
    %v329 = vrot.slane %v127, %v328
    %v348 = vunpack.c.l.b16 %v109
    %v349 = vunpack.c.h.b16 %v109
    %v350 = vunpack.c.l.b16 %v110
    %v351 = vunpack.c.h.b16 %v110
    %v352 = vunpack.c.l.b16 %v111
    %v353 = vunpack.c.h.b16 %v111
    %v354 = vunpack.c.l.b16 %v112
    %v355 = vunpack.c.h.b16 %v112
    %v356 = vunpack.c.l.b16 %v113
    %v357 = vunpack.c.h.b16 %v113
    %v358 = vunpack.c.l.b16 %v114
    %v359 = vunpack.c.h.b16 %v114
    %v360 = vunpack.c.l.b16 %v115
    %v361 = vunpack.c.h.b16 %v115
    %v362 = vunpack.c.l.b16 %v116
    %v363 = vunpack.c.h.b16 %v116
    %v364 = vunpack.c.l.b16 %v117
    %v365 = vunpack.c.h.b16 %v117
    %v366 = vunpack.c.l.b16 %v118
    %v367 = vunpack.c.h.b16 %v118
    %v368 = vunpack.c.l.b16 %v119
    %v369 = vunpack.c.h.b16 %v119
    %v370 = vunpack.c.l.b16 %v120
    %v371 = vunpack.c.h.b16 %v120
    %v372 = vunpack.c.l.b16 %v121
    %v373 = vunpack.c.h.b16 %v121
    %v374 = vunpack.c.l.b16 %v122
    %v375 = vunpack.c.h.b16 %v122
    %v376 = vunpack.c.l.b16 %v123
    %v377 = vunpack.c.h.b16 %v123
    %v378 = vunpack.c.l.b16 %v124
    %v379 = vunpack.c.h.b16 %v124
    %v380 = vpack.c.b16 %v350, %v348
    %v381 = vpack.c.b16 %v351, %v349
    %v382 = vpack.c.b16 %v354, %v352
    %v383 = vpack.c.b16 %v355, %v353
    %v384 = vpack.c.b16 %v358, %v356
    %v385 = vpack.c.b16 %v359, %v357
    %v386 = vpack.c.b16 %v362, %v360
    %v387 = vpack.c.b16 %v363, %v361
    %v388 = vpack.c.b16 %v366, %v364
    %v389 = vpack.c.b16 %v367, %v365
    %v390 = vpack.c.b16 %v370, %v368
    %v391 = vpack.c.b16 %v371, %v369
    %v392 = vpack.c.b16 %v374, %v372
    %v393 = vpack.c.b16 %v375, %v373
    %v394 = vpack.c.b16 %v378, %v376
    %v395 = vpack.c.b16 %v379, %v377
    %412 = vmatprep.subr.bf16.mxu0 %v381
    %413 = vmatpush1.bf16.msra.mxu0 %v380
    %414 = vmatprep.subr.bf16.mxu0 %v383
    %415 = vmatpush1.bf16.msra.mxu0 %v382
    %416 = vmatprep.subr.bf16.mxu0 %v385
    %417 = vmatpush1.bf16.msra.mxu0 %v384
    %418 = vmatprep.subr.bf16.mxu0 %v387
    %419 = vmatpush1.bf16.msra.mxu0 %v386
    %420 = vmatprep.subr.bf16.mxu0 %v389
    %421 = vmatpush1.bf16.msra.mxu0 %v388
    %422 = vmatprep.subr.bf16.mxu0 %v391
    %423 = vmatpush1.bf16.msra.mxu0 %v390
    %424 = vmatprep.subr.bf16.mxu0 %v393
    %425 = vmatpush1.bf16.msra.mxu0 %v392
    %426 = vmatprep.subr.bf16.mxu0 %v395
    %427 = vmatpush1.bf16.msra.mxu0 %v394
    %428 = vmatprep.subr.bf16.mxu0 0
    %429 = vmatpush1.bf16.msra.mxu0 0
    %430 = vmatprep.subr.bf16.mxu0 0
    %431 = vmatpush1.bf16.msra.mxu0 0
    %432 = vmatprep.subr.bf16.mxu0 0
    %433 = vmatpush1.bf16.msra.mxu0 0
    %434 = vmatprep.subr.bf16.mxu0 0
    %435 = vmatpush1.bf16.msra.mxu0 0
    %436 = vmatprep.subr.bf16.mxu0 0
    %437 = vmatpush1.bf16.msra.mxu0 0
    %438 = vmatprep.subr.bf16.mxu0 0
    %439 = vmatpush1.bf16.msra.mxu0 0
    %440 = vmatprep.subr.bf16.mxu0 0
    %441 = vmatpush1.bf16.msra.mxu0 0
    %442 = vmatprep.subr.bf16.mxu0 0
    %443 = vmatpush1.bf16.msra.mxu0 0
    %444 = vmatprep.mubr.bf16.mxu0 0
    %445 = vmatmul.mubr.bf16.gmra.mrb[0].mxu0 %v320
    %v446 = vpop.f32.mrb[0].mxu0
    %v447 = vadd.f32 %v325, %v446
    %v448 = vpop.f32.mrb[0].mxu0
    %v449 = vadd.f32 %v329, %v448
    %v450 = vpop.f32.mrb[0].mxu0
    %v451 = vpop.f32.mrb[0].mxu0
    %452 = vdwg.mxu0
    %v453 = vadd.f32 %v75, %v449
    %v454 = vmul.f32 %v447, 1.442695
    %v455 = vpow.pop %v454
    %v456 = vmul.f32 %v453, %v455
    %457 = vadd.xlane.f32.xlu0 %v447
    %v458 = vpop.xlane.xlu0 %457
    %v459 = vadd.f32 %v76, %v458
    %460 = vst [vmem:[#allocation8] sm:$0xff] %v456
    %462 = vset.pattern.permute.xlu0 0
    %463 = vperm.xlu0 %462, %v459
    %v464 = vpop.permute.xlu0 %463
    %vm466 = vcmask 64512
    %467 = vst.msk [vmem:[#allocation9] sm:$0xff] %vm466, %v464
    // Predicated region
    $region46: #{tpu_custom_call.1} parent=1 // pred_check
      _
    $region47: #{tpu_custom_call.1} parent=1 // pred_check_branch
      %469 = sbr.rel (0) target = $region49
    $region48: #{tpu_custom_call.1} parent=1 // pred_region
      %s471 = ssub.s32 128, 128
      %472 = vsyncadd [#allocation4], %s471
      %s474 = sshll.u32 [#allocation8], 4
      %s475 = int_to_ptr.vmem [resolvable:$true] %s474
      %477 = dma.vmem_to_hbm [thread:$0]  %s475, 128, %s8, [#allocation4]
    $region49: #{tpu_custom_call.1} parent=1 // pred_fallthru
      _
    // Predicated region
    $region50: #{tpu_custom_call.1} parent=1 // pred_check
      _
    $region51: #{tpu_custom_call.1} parent=1 // pred_check_branch
      %479 = sbr.rel (0) target = $region53
    $region52: #{tpu_custom_call.1} parent=1 // pred_region
      %s481 = ssub.s32 128, 128
      %482 = vsyncadd [#allocation10], %s481
      %s484 = sshll.u32 [#allocation9], 4
      %s485 = int_to_ptr.vmem [resolvable:$true] %s484
      %487 = dma.vmem_to_hbm [thread:$0]  %s485, 128, %s9, [#allocation10]
    $region53: #{tpu_custom_call.1} parent=1 // pred_fallthru
      _
    // Predicated region
    $region54: #{tpu_custom_call.1} parent=1 // pred_check
      _
    $region55: #{tpu_custom_call.1} parent=1 // pred_check_branch
      %489 = sbr.rel (0) target = $region57
    $region56: #{tpu_custom_call.1} parent=1 // pred_region
      %490 = dma.done [#allocation4], 128
    $region57: #{tpu_custom_call.1} parent=1 // pred_fallthru
      _
    // Predicated region
    $region58: #{tpu_custom_call.1} parent=1 // pred_check
      _
    $region59: #{tpu_custom_call.1} parent=1 // pred_check_branch
      %492 = sbr.rel (0) target = $region61
    $region60: #{tpu_custom_call.1} parent=1 // pred_region
      %493 = dma.done [#allocation10], 128
    $region61: #{tpu_custom_call.1} parent=1 // pred_fallthru
      _
    %494 = vsyncpa [#allocation3], 1
    %495 = vsyncpa [#allocation6], 1
    %496 = vsyncpa [#allocation4], 1
    %497 = vsyncpa [#allocation10], 1

</llo_original>
